<compile_context>
chip_gen: v7x
topology: tpu7x:2x2x1
jax: 0.10.0
libtpu: 0.0.40
codegen_flags: <defaults>
</compile_context>

<pallas_src>
import functools
import math

import jax
import jax.numpy as jnp
from jax.experimental import pallas as pl
from jax.experimental.pallas import tpu as pltpu

_LANE = 128
_SUBLANE = 8
# Budget for the double-buffered in/out tiles: safe on v7x (64 MiB physical),
# comfortable on v5e/v6e (128 MiB physical).
_TILE_VMEM_BUDGET = 24 * 1024 * 1024
_VMEM_LIMIT_BYTES = 48 * 1024 * 1024
_MAX_ROW_TILE = 2048


def _round_up(x, m):
    return ((x + m - 1) // m) * m


def _choose_row_tile(n_rows, lane_width, itemsize):
    """Largest multiple-of-8 row tile within the VMEM budget, while keeping
    ~4+ grid steps when there are enough rows (TC sharding on v7x)."""
    bytes_per_row = 2 * 2 * lane_width * itemsize  # double-buffered in + out
    vmem_tile = max(_SUBLANE,
                    (_TILE_VMEM_BUDGET // bytes_per_row) // _SUBLANE * _SUBLANE)
    vmem_tile = min(vmem_tile, _MAX_ROW_TILE)
    target = _round_up(max(_SUBLANE, pl.cdiv(n_rows, 4)), _SUBLANE)
    tile = min(vmem_tile, target, _round_up(n_rows, _SUBLANE))
    return max(_SUBLANE, tile)


def _ln_kernel_rowwise(x_ref, gamma_ref, beta_ref, o_ref, *, features, eps):
    """One logical row per sublane row; D lanes per row (D >= 128 or D∤128)."""
    x = x_ref[...].astype(jnp.float32)                       # (tile, D)
    mean = jnp.mean(x, axis=-1, keepdims=True)               # (tile, 1)
    centered = x - mean
    var = jnp.sum(centered * centered, axis=-1, keepdims=True) / jnp.float32(
        features - 1)                                        # unbiased (ddof=1)
    inv = pl.reciprocal(jnp.sqrt(var) + eps, approx=False)   # (tile, 1)
    gamma = gamma_ref[...].astype(jnp.float32)               # (1, D)
    beta = beta_ref[...].astype(jnp.float32)                 # (1, D)
    o_ref[...] = (centered * inv * gamma + beta).astype(o_ref.dtype)


def _ln_kernel_folded(x_ref, gamma_ref, beta_ref, seg_ref, o_ref, *, features, eps):
    """g = 128 // D logical rows packed into each 128-lane row (lane-dense)."""
    x = x_ref[...].astype(jnp.float32)                       # (tile, 128)
    seg = seg_ref[...]                                       # (128,128) block-diag ones
    # Per-segment sums broadcast back over each segment's lanes (MXU is idle
    # otherwise; avoids cross-lane reshapes).
    mean = jnp.dot(x, seg, preferred_element_type=jnp.float32) * (1.0 / features)
    centered = x - mean
    sq_sum = jnp.dot(centered * centered, seg, preferred_element_type=jnp.float32)
    var = sq_sum / jnp.float32(features - 1)
    inv = pl.reciprocal(jnp.sqrt(var) + eps, approx=False)
    gamma = gamma_ref[...].astype(jnp.float32)               # (1, 128): gamma tiled g×
    beta = beta_ref[...].astype(jnp.float32)
    o_ref[...] = (centered * inv * gamma + beta).astype(o_ref.dtype)


def layer_norm(x, gamma, beta, eps=1e-6):
    """x: (..., D); gamma, beta: (D,)."""
    orig_shape = x.shape
    orig_dtype = x.dtype
    D = orig_shape[-1]
    rows = math.prod(orig_shape[:-1])
    x2 = x.reshape(rows, D)

    # Lane-dense packing for small D.
    fold = (D < _LANE) and (_LANE % D == 0)
    g = _LANE // D if fold else 1
    lane_width = g * D

    packed_rows = pl.cdiv(rows, g)
    tile = _choose_row_tile(packed_rows, lane_width, jnp.dtype(orig_dtype).itemsize)
    padded_packed = _round_up(packed_rows, tile)
    padded_rows = padded_packed * g

    if padded_rows != rows:
        x2 = jnp.pad(x2, ((0, padded_rows - rows), (0, 0)))
    xp = x2.reshape(padded_packed, lane_width)   # contiguous -> free reshape

    gamma_l = jnp.tile(gamma.reshape(1, D).astype(jnp.float32), (1, g))
    beta_l = jnp.tile(beta.reshape(1, D).astype(jnp.float32), (1, g))

    grid = (padded_packed // tile,)

    in_specs = [
        pl.BlockSpec((tile, lane_width), lambda i: (i, 0)),
        pl.BlockSpec((1, lane_width), lambda i: (0, 0)),
        pl.BlockSpec((1, lane_width), lambda i: (0, 0)),
    ]
    out_spec = pl.BlockSpec((tile, lane_width), lambda i: (i, 0))

    if fold:
        lane_idx = jnp.arange(lane_width)
        seg = (lane_idx[:, None] // D == lane_idx[None, :] // D).astype(jnp.float32)
        kernel = functools.partial(_ln_kernel_folded, features=D, eps=eps)
        in_specs.append(pl.BlockSpec((lane_width, lane_width), lambda i: (0, 0)))
        args = (xp, gamma_l, beta_l, seg)
    else:
        # TODO(synk): for very large D (a single (8, D) f32 block exceeding VMEM)
        # add a second "arbitrary" grid axis over D with a two-pass sum/sumsq
        # reduction.
        kernel = functools.partial(_ln_kernel_rowwise, features=D, eps=eps)
        args = (xp, gamma_l, beta_l)

    out = pl.pallas_call(
        kernel,
        out_shape=jax.ShapeDtypeStruct((padded_packed, lane_width), orig_dtype),
        grid_spec=pltpu.PrefetchScalarGridSpec(
            num_scalar_prefetch=0,
            grid=grid,
            in_specs=in_specs,
            out_specs=out_spec,
        ),
        compiler_params=pltpu.CompilerParams(
            dimension_semantics=("parallel",),
            vmem_limit_bytes=_VMEM_LIMIT_BYTES,
        ),
    )(*args)

    out = out.reshape(padded_rows, D)
    if padded_rows != rows:
        out = out[:rows]
    return out.reshape(orig_shape)


def layer_norm_ref(x, gamma, beta, eps=1e-6):
    """Pure-JAX reference matching the PyTorch forward exactly."""
    mean = jnp.mean(x, axis=-1, keepdims=True)
    std = jnp.std(x, axis=-1, keepdims=True, ddof=1)
    return gamma * (x - mean) / (std + eps) + beta


if __name__ == "__main__":
    key = jax.random.PRNGKey(0)

    # Primary shape implied by the module's typical use (hidden=32 -> folded,
    # lane-dense path).
    batch, seq, hidden = 2, 8, 32
    x = jax.random.normal(key, (batch, seq, hidden), dtype=jnp.float32)
    gamma = jnp.ones((hidden,), dtype=jnp.float32)   # nn.Parameter(torch.ones)
    beta = jnp.zeros((hidden,), dtype=jnp.float32)   # nn.Parameter(torch.zeros)

    out = jax.block_until_ready(layer_norm(x, gamma, beta))
    ref = layer_norm_ref(x, gamma, beta)
    assert out.shape == x.shape
    assert jnp.allclose(out, ref, atol=1e-5, rtol=1e-5), "mismatch vs reference (folded path)"

    # Secondary check: odd row count + D not a multiple of 128 (row-wise path,
    # exercises cdiv + padding and the affine params).
    k1, k2, k3 = jax.random.split(key, 3)
    x2 = jax.random.normal(k1, (3, 5, 160), dtype=jnp.float32)
    g2 = jax.random.normal(k2, (160,), dtype=jnp.float32)
    b2 = jax.random.normal(k3, (160,), dtype=jnp.float32)
    out2 = jax.block_until_ready(layer_norm(x2, g2, b2))
    ref2 = layer_norm_ref(x2, g2, b2)
    assert out2.shape == x2.shape
    assert jnp.allclose(out2, ref2, atol=1e-5, rtol=1e-5), "mismatch vs reference (row path)"

    print("KERNEL_OK")
</pallas_src>

<mosaic_0001>
module attributes {stable_mosaic.version = 11 : i64} {
  func.func @_ln_kernel_folded(%arg0: i32, %arg1: memref<8x128xf32, #tpu.memory_space<vmem>>, %arg2: memref<1x128xf32, #tpu.memory_space<vmem>>, %arg3: memref<1x128xf32, #tpu.memory_space<vmem>>, %arg4: memref<128x128xf32, #tpu.memory_space<vmem>>, %arg5: memref<8x128xf32, #tpu.memory_space<vmem>>) attributes {dimension_semantics = [#tpu.dimension_semantics<parallel>], iteration_bounds = array<i64: 1>, scalar_prefetch = 0 : i64, scratch_operands = 0 : i64, tpu.core_type = #tpu.core_type<tc>, window_params = [{transform_indices = @transform_0, window_bounds = array<i64: 8, 128>}, {pipeline_mode = #tpu.pipeline_mode<synchronous>, transform_indices = @transform_1, window_bounds = array<i64: 1, 128>}, {pipeline_mode = #tpu.pipeline_mode<synchronous>, transform_indices = @transform_2, window_bounds = array<i64: 1, 128>}, {pipeline_mode = #tpu.pipeline_mode<synchronous>, transform_indices = @transform_3, window_bounds = array<i64: 128, 128>}, {transform_indices = @transform_4, window_bounds = array<i64: 8, 128>}]} {
    %c0 = arith.constant 0 : index
    %c0_0 = arith.constant 0 : index
    %0 = vector.load %arg1[%c0, %c0_0] : memref<8x128xf32, #tpu.memory_space<vmem>>, vector<8x128xf32>
    %c0_1 = arith.constant 0 : index
    %c0_2 = arith.constant 0 : index
    %1 = vector.load %arg4[%c0_1, %c0_2] : memref<128x128xf32, #tpu.memory_space<vmem>>, vector<128x128xf32>
    %cst = arith.constant dense<0.000000e+00> : vector<8x128xf32>
    %2 = tpu.matmul %0, %1, %cst {dimension_numbers = #tpu.dot_dimension_numbers<[1], [0], [0], [1], [0, 0, 1, 1], [], []>} : vector<8x128xf32>, vector<128x128xf32>, vector<8x128xf32> -> vector<8x128xf32>
    %cst_3 = arith.constant 3.125000e-02 : f32
    %3 = vector.broadcast %cst_3 : f32 to vector<8x128xf32>
    %4 = arith.mulf %2, %3 : vector<8x128xf32>
    %5 = arith.subf %0, %4 : vector<8x128xf32>
    %6 = arith.mulf %5, %5 : vector<8x128xf32>
    %cst_4 = arith.constant dense<0.000000e+00> : vector<8x128xf32>
    %7 = tpu.matmul %6, %1, %cst_4 {dimension_numbers = #tpu.dot_dimension_numbers<[1], [0], [0], [1], [0, 0, 1, 1], [], []>} : vector<8x128xf32>, vector<128x128xf32>, vector<8x128xf32> -> vector<8x128xf32>
    %cst_5 = arith.constant 3.100000e+01 : f32
    %8 = vector.broadcast %cst_5 : f32 to vector<8x128xf32>
    %9 = arith.divf %7, %8 : vector<8x128xf32>
    %10 = math.sqrt %9 : vector<8x128xf32>
    %cst_6 = arith.constant 9.99999997E-7 : f32
    %11 = vector.broadcast %cst_6 : f32 to vector<8x128xf32>
    %12 = arith.addf %10, %11 : vector<8x128xf32>
    %13 = tpu.reciprocal %12 : vector<8x128xf32> -> vector<8x128xf32>
    %c0_7 = arith.constant 0 : index
    %c0_8 = arith.constant 0 : index
    %14 = vector.load %arg2[%c0_7, %c0_8] : memref<1x128xf32, #tpu.memory_space<vmem>>, vector<1x128xf32>
    %c0_9 = arith.constant 0 : index
    %c0_10 = arith.constant 0 : index
    %15 = vector.load %arg3[%c0_9, %c0_10] : memref<1x128xf32, #tpu.memory_space<vmem>>, vector<1x128xf32>
    %16 = arith.mulf %5, %13 : vector<8x128xf32>
    %17 = vector.broadcast %14 : vector<1x128xf32> to vector<8x128xf32>
    %18 = arith.mulf %16, %17 : vector<8x128xf32>
    %19 = vector.broadcast %15 : vector<1x128xf32> to vector<8x128xf32>
    %20 = arith.addf %18, %19 : vector<8x128xf32>
    %c0_11 = arith.constant 0 : index
    %c0_12 = arith.constant 0 : index
    %21 = vector.load %arg5[%c0_11, %c0_12] : memref<8x128xf32, #tpu.memory_space<vmem>>, vector<8x128xf32>
    tpu.vector_store %arg5[%c0_11, %c0_12], %20 {strides = array<i32>} : memref<8x128xf32, #tpu.memory_space<vmem>>, vector<8x128xf32>,
    return
  }
  func.func @transform_0(%arg0: i32) -> (i32, i32) {
    %c0_i32 = arith.constant 0 : i32
    %c0_i32_0 = arith.constant 0 : i32
    return %arg0, %c0_i32 : i32, i32
  }
  func.func @transform_1(%arg0: i32) -> (i32, i32) {
    %c0_i32 = arith.constant 0 : i32
    %c0_i32_0 = arith.constant 0 : i32
    %c0_i32_1 = arith.constant 0 : i32
    return %c0_i32, %c0_i32_0 : i32, i32
  }
  func.func @transform_2(%arg0: i32) -> (i32, i32) {
    %c0_i32 = arith.constant 0 : i32
    %c0_i32_0 = arith.constant 0 : i32
    %c0_i32_1 = arith.constant 0 : i32
    return %c0_i32, %c0_i32_0 : i32, i32
  }
  func.func @transform_3(%arg0: i32) -> (i32, i32) {
    %c0_i32 = arith.constant 0 : i32
    %c0_i32_0 = arith.constant 0 : i32
    %c0_i32_1 = arith.constant 0 : i32
    return %c0_i32, %c0_i32_0 : i32, i32
  }
  func.func @transform_4(%arg0: i32) -> (i32, i32) {
    %c0_i32 = arith.constant 0 : i32
    %c0_i32_0 = arith.constant 0 : i32
    return %arg0, %c0_i32 : i32, i32
  }
}

</mosaic_0001>

<llo_original>
// kernel: tpu_custom_call.1
$region0: #{tpu_custom_call.1}
  #allocation0 [shape = 'u32[]', space=smem, size = 0x4, offset = 0x4, fixed_abs, tag = 'smem constant byte address 0x4 - core index']
  #allocation1 [shape = 'u32[144,128]{1,0:T(1,128)}', space=vmem, size = 0x12000, scoped, tag = 'internal scratch']
  %s0 = inlined_call_operand.hbm [shape: f32[8,128], index: 0, kind: input, shape index: {}]
  %s1 = inlined_call_operand.vmem [shape: f32[1,128], index: 1, kind: input, shape index: {}]
  %s2 = inlined_call_operand.vmem [shape: f32[1,128], index: 2, kind: input, shape index: {}]
  %s3 = inlined_call_operand.hbm [shape: f32[128,128], index: 3, kind: input, shape index: {}]
  %s4 = inlined_call_operand.hbm [shape: f32[8,128], index: 4, kind: output, shape index: {}]
  %s5 = sld [smem:[#allocation0]]
  $region34: #{tpu_custom_call.1} parent=0
    _
  %s7 = ssub.s32 1, %s5
  %s8 = scalar_select 0, %s7, %s5
  $region1: #{tpu_custom_call.1} parent=0
    #allocation2 [shape = 'u8[4096]{0}', space=vmem, size = 0x1000, scoped, tag = 'input window, operand 0, single buffered']
    #allocation3 [shape = 's32[1]{0}', space=sflag, size = 0x4, scoped, tag = 'scoped memory for tpu_custom_call.1']
    #allocation4 [shape = 's32[1]{0}', space=sflag, size = 0x4, scoped, tag = 'scoped memory for tpu_custom_call.1']
    #allocation5 [shape = 'u8[65536]{0}', space=vmem, size = 0x10000, scoped, tag = 'input window, operand 3, single buffered']
    #allocation6 [shape = 's32[1]{0}', space=sflag, size = 0x4, scoped, tag = 'scoped memory for tpu_custom_call.1']
    #allocation7 [shape = 'u8[4096]{0}', space=vmem, size = 0x1000, scoped, tag = 'output window, operand 0, single buffered']
    %9 = vsyncpa [#allocation3], 0
    %10 = vsyncpa [#allocation6], 0
    %11 = vsyncpa [#allocation4], 0
    // Predicated region
    $region2: #{tpu_custom_call.1} parent=1 // pred_check
      _
    $region3: #{tpu_custom_call.1} parent=1 // pred_check_branch
      %13 = sbr.rel (0) target = $region5
    $region4: #{tpu_custom_call.1} parent=1 // pred_region
      %s15 = ssub.s32 128, 128
      %16 = vsyncadd [#allocation3], %s15
      %s18 = sshll.u32 [#allocation2], 4
      %s19 = int_to_ptr.vmem [resolvable:$true] %s18
      %21 = dma.hbm_to_vmem [thread:$0]  %s0, 128, %s19, [#allocation3]
    $region5: #{tpu_custom_call.1} parent=1 // pred_fallthru
      _
    // Predicated region
    $region6: #{tpu_custom_call.1} parent=1 // pred_check
      _
    $region7: #{tpu_custom_call.1} parent=1 // pred_check_branch
      %23 = sbr.rel (0) target = $region9
    $region8: #{tpu_custom_call.1} parent=1 // pred_region
      _
    $region9: #{tpu_custom_call.1} parent=1 // pred_fallthru
      _
    // Predicated region
    $region10: #{tpu_custom_call.1} parent=1 // pred_check
      _
    $region11: #{tpu_custom_call.1} parent=1 // pred_check_branch
      %25 = sbr.rel (0) target = $region13
    $region12: #{tpu_custom_call.1} parent=1 // pred_region
      _
    $region13: #{tpu_custom_call.1} parent=1 // pred_fallthru
      _
    // Predicated region
    $region14: #{tpu_custom_call.1} parent=1 // pred_check
      _
    $region15: #{tpu_custom_call.1} parent=1 // pred_check_branch
      %27 = sbr.rel (0) target = $region17
    $region16: #{tpu_custom_call.1} parent=1 // pred_region
      %s29 = ssub.s32 2048, 2048
      %30 = vsyncadd [#allocation6], %s29
      %s31 = sshll.u32 [#allocation5], 4
      %s32 = int_to_ptr.vmem [resolvable:$true] %s31
      %37 = dma.hbm_to_vmem [thread:$0]  %s3, 2048, %s32, [#allocation6], 128, 128, 8
    $region17: #{tpu_custom_call.1} parent=1 // pred_fallthru
      _
    // Predicated region
    $region18: #{tpu_custom_call.1} parent=1 // pred_check
      _
    $region19: #{tpu_custom_call.1} parent=1 // pred_check_branch
      %39 = sbr.rel (0) target = $region21
    $region20: #{tpu_custom_call.1} parent=1 // pred_region
      %40 = dma.done [#allocation3], 128
    $region21: #{tpu_custom_call.1} parent=1 // pred_fallthru
      _
    // Predicated region
    $region22: #{tpu_custom_call.1} parent=1 // pred_check
      _
    $region23: #{tpu_custom_call.1} parent=1 // pred_check_branch
      %42 = sbr.rel (0) target = $region25
    $region24: #{tpu_custom_call.1} parent=1 // pred_region
      %43 = dma.done [#allocation6], 2048
    $region25: #{tpu_custom_call.1} parent=1 // pred_fallthru
      _
    %v44 = vld [vmem:[#allocation2] sm:$0xff]
    %v45 = vld [vmem:[#allocation5] sm:$0xff]
    %v46 = vld [vmem:[#allocation5 + $0x8] sm:$0xff]
    %v47 = vld [vmem:[#allocation5 + $0x10] sm:$0xff]
    %v48 = vld [vmem:[#allocation5 + $0x18] sm:$0xff]
    %v49 = vld [vmem:[#allocation5 + $0x20] sm:$0xff]
    %v50 = vld [vmem:[#allocation5 + $0x28] sm:$0xff]
    %v51 = vld [vmem:[#allocation5 + $0x30] sm:$0xff]
    %v52 = vld [vmem:[#allocation5 + $0x38] sm:$0xff]
    %v53 = vld [vmem:[#allocation5 + $0x40] sm:$0xff]
    %v54 = vld [vmem:[#allocation5 + $0x48] sm:$0xff]
    %v55 = vld [vmem:[#allocation5 + $0x50] sm:$0xff]
    %v56 = vld [vmem:[#allocation5 + $0x58] sm:$0xff]
    %v57 = vld [vmem:[#allocation5 + $0x60] sm:$0xff]
    %v58 = vld [vmem:[#allocation5 + $0x68] sm:$0xff]
    %v59 = vld [vmem:[#allocation5 + $0x70] sm:$0xff]
    %v60 = vld [vmem:[#allocation5 + $0x78] sm:$0xff]
    %61 = vmatprep.subr.mxu0 0.0
    %62 = vmatpush1.msra.mxu0 %v45
    %63 = vmatprep.subr.mxu0 0.0
    %64 = vmatpush1.msra.mxu0 %v46
    %65 = vmatprep.subr.mxu0 0.0
    %66 = vmatpush1.msra.mxu0 %v47
    %67 = vmatprep.subr.mxu0 0.0
    %68 = vmatpush1.msra.mxu0 %v48
    %69 = vmatprep.subr.mxu0 0.0
    %70 = vmatpush1.msra.mxu0 %v49
    %71 = vmatprep.subr.mxu0 0.0
    %72 = vmatpush1.msra.mxu0 %v50
    %73 = vmatprep.subr.mxu0 0.0
    %74 = vmatpush1.msra.mxu0 %v51
    %75 = vmatprep.subr.mxu0 0.0
    %76 = vmatpush1.msra.mxu0 %v52
    %77 = vmatprep.subr.mxu0 0.0
    %78 = vmatpush1.msra.mxu0 %v53
    %79 = vmatprep.subr.mxu0 0.0
    %80 = vmatpush1.msra.mxu0 %v54
    %81 = vmatprep.subr.mxu0 0.0
    %82 = vmatpush1.msra.mxu0 %v55
    %83 = vmatprep.subr.mxu0 0.0
    %84 = vmatpush1.msra.mxu0 %v56
    %85 = vmatprep.subr.mxu0 0.0
    %86 = vmatpush1.msra.mxu0 %v57
    %87 = vmatprep.subr.mxu0 0.0
    %88 = vmatpush1.msra.mxu0 %v58
    %89 = vmatprep.subr.mxu0 0.0
    %90 = vmatpush1.msra.mxu0 %v59
    %91 = vmatprep.subr.mxu0 0.0
    %92 = vmatpush1.msra.mxu0 %v60
    %93 = vmatprep.subr.mxu0 0.0
    %94 = vmatpush1.msra.mxu0 0.0
    %95 = vmatprep.subr.mxu0 0.0
    %96 = vmatpush1.msra.mxu0 0.0
    %97 = vmatprep.subr.mxu0 0.0
    %98 = vmatpush1.msra.mxu0 0.0
    %99 = vmatprep.subr.mxu0 0.0
    %100 = vmatpush1.msra.mxu0 0.0
    %101 = vmatprep.subr.mxu0 0.0
    %102 = vmatpush1.msra.mxu0 0.0
    %103 = vmatprep.subr.mxu0 0.0
    %104 = vmatpush1.msra.mxu0 0.0
    %105 = vmatprep.subr.mxu0 0.0
    %106 = vmatpush1.msra.mxu0 0.0
    %107 = vmatprep.subr.mxu0 0.0
    %108 = vmatpush1.msra.mxu0 0.0
    %109 = vmatprep.subr.mxu0 0.0
    %110 = vmatpush1.msra.mxu0 0.0
    %111 = vmatprep.subr.mxu0 0.0
    %112 = vmatpush1.msra.mxu0 0.0
    %113 = vmatprep.subr.mxu0 0.0
    %114 = vmatpush1.msra.mxu0 0.0
    %115 = vmatprep.subr.mxu0 0.0
    %116 = vmatpush1.msra.mxu0 0.0
    %117 = vmatprep.subr.mxu0 0.0
    %118 = vmatpush1.msra.mxu0 0.0
    %119 = vmatprep.subr.mxu0 0.0
    %120 = vmatpush1.msra.mxu0 0.0
    %121 = vmatprep.subr.mxu0 0.0
    %122 = vmatpush1.msra.mxu0 0.0
    %123 = vmatprep.subr.mxu0 0.0
    %124 = vmatpush1.msra.mxu0 0.0
    %125 = vmatprep.mubr.f32.mxu0 0.0
    %126 = vmatmul.mubr.f32.gmra.mrb[0].mxu0 %v44
    %v127 = vpop.f32.mrb[0].mxu0
    %v128 = vadd.f32 0.0, %v127
    %v129 = vpop.f32.mrb[0].mxu0
    %130 = vdwg.mxu0
    %v131 = vmul.f32 %v128, 0.03125
    %v132 = vsub.f32 %v44, %v131
    %v133 = vmul.f32 %v132, %v132
    %134 = vmatprep.subr.mxu0 0.0
    %135 = vmatpush1.msra.mxu0 %v45
    %136 = vmatprep.subr.mxu0 0.0
    %137 = vmatpush1.msra.mxu0 %v46
    %138 = vmatprep.subr.mxu0 0.0
    %139 = vmatpush1.msra.mxu0 %v47
    %140 = vmatprep.subr.mxu0 0.0
    %141 = vmatpush1.msra.mxu0 %v48
    %142 = vmatprep.subr.mxu0 0.0
    %143 = vmatpush1.msra.mxu0 %v49
    %144 = vmatprep.subr.mxu0 0.0
    %145 = vmatpush1.msra.mxu0 %v50
    %146 = vmatprep.subr.mxu0 0.0
    %147 = vmatpush1.msra.mxu0 %v51
    %148 = vmatprep.subr.mxu0 0.0
    %149 = vmatpush1.msra.mxu0 %v52
    %150 = vmatprep.subr.mxu0 0.0
    %151 = vmatpush1.msra.mxu0 %v53
    %152 = vmatprep.subr.mxu0 0.0
    %153 = vmatpush1.msra.mxu0 %v54
    %154 = vmatprep.subr.mxu0 0.0
    %155 = vmatpush1.msra.mxu0 %v55
    %156 = vmatprep.subr.mxu0 0.0
    %157 = vmatpush1.msra.mxu0 %v56
    %158 = vmatprep.subr.mxu0 0.0
    %159 = vmatpush1.msra.mxu0 %v57
    %160 = vmatprep.subr.mxu0 0.0
    %161 = vmatpush1.msra.mxu0 %v58
    %162 = vmatprep.subr.mxu0 0.0
    %163 = vmatpush1.msra.mxu0 %v59
    %164 = vmatprep.subr.mxu0 0.0
    %165 = vmatpush1.msra.mxu0 %v60
    %166 = vmatprep.subr.mxu0 0.0
    %167 = vmatpush1.msra.mxu0 0.0
    %168 = vmatprep.subr.mxu0 0.0
    %169 = vmatpush1.msra.mxu0 0.0
    %170 = vmatprep.subr.mxu0 0.0
    %171 = vmatpush1.msra.mxu0 0.0
    %172 = vmatprep.subr.mxu0 0.0
    %173 = vmatpush1.msra.mxu0 0.0
    %174 = vmatprep.subr.mxu0 0.0
    %175 = vmatpush1.msra.mxu0 0.0
    %176 = vmatprep.subr.mxu0 0.0
    %177 = vmatpush1.msra.mxu0 0.0
    %178 = vmatprep.subr.mxu0 0.0
    %179 = vmatpush1.msra.mxu0 0.0
    %180 = vmatprep.subr.mxu0 0.0
    %181 = vmatpush1.msra.mxu0 0.0
    %182 = vmatprep.subr.mxu0 0.0
    %183 = vmatpush1.msra.mxu0 0.0
    %184 = vmatprep.subr.mxu0 0.0
    %185 = vmatpush1.msra.mxu0 0.0
    %186 = vmatprep.subr.mxu0 0.0
    %187 = vmatpush1.msra.mxu0 0.0
    %188 = vmatprep.subr.mxu0 0.0
    %189 = vmatpush1.msra.mxu0 0.0
    %190 = vmatprep.subr.mxu0 0.0
    %191 = vmatpush1.msra.mxu0 0.0
    %192 = vmatprep.subr.mxu0 0.0
    %193 = vmatpush1.msra.mxu0 0.0
    %194 = vmatprep.subr.mxu0 0.0
    %195 = vmatpush1.msra.mxu0 0.0
    %196 = vmatprep.subr.mxu0 0.0
    %197 = vmatpush1.msra.mxu0 0.0
    %198 = vmatprep.mubr.f32.mxu0 0.0
    %199 = vmatmul.mubr.f32.gmra.mrb[0].mxu0 %v133
    %v200 = vpop.f32.mrb[0].mxu0
    %v201 = vadd.f32 0.0, %v200
    %v202 = vpop.f32.mrb[0].mxu0
    %203 = vdwg.mxu0
    %v204 = vrcp.pop 31.0
    %v205 = vmul.f32 %v201, %v204
    %v206 = vrsqrt.pop %v205
    %v207 = vmul.f32 %v205, %v206
    %vm208 = vcmp.eq.f32.partialorder %v205, inf
    %v209 = vsel %vm208, %v205, %v207
    %vm210 = vcmp.eq.f32.partialorder %v205, 0.0
    %v211 = vand.u32 %v205, 2147483648
    %v212 = vsel %vm210, %v211, %v209
    %v213 = vadd.f32 %v212, 1e-06
    %v214 = vrcp.pop %v213
    %v215 = vld [vmem:[%s1] sm:$0x1]
    %v216 = vld [vmem:[%s2] sm:$0x1]
    %v217 = vmul.f32 %v132, %v214
    %v219 = vlaneseq
    %v220 = vshrl.u32 %v219, 7
    %v221 = vsub.s32 0, %v220
    %v222 = vrot.slane %v215, %v221
    %v224 = vmul.f32 %v217, %v222
    %v226 = vlaneseq
    %v227 = vshrl.u32 %v226, 7
    %v228 = vsub.s32 0, %v227
    %v229 = vrot.slane %v216, %v228
    %v231 = vadd.f32 %v224, %v229
    %232 = vst [vmem:[#allocation7] sm:$0xff] %v231
    // Predicated region
    $region26: #{tpu_custom_call.1} parent=1 // pred_check
      _
    $region27: #{tpu_custom_call.1} parent=1 // pred_check_branch
      %234 = sbr.rel (0) target = $region29
    $region28: #{tpu_custom_call.1} parent=1 // pred_region
      %s236 = ssub.s32 128, 128
      %237 = vsyncadd [#allocation4], %s236
      %s239 = sshll.u32 [#allocation7], 4
      %s240 = int_to_ptr.vmem [resolvable:$true] %s239
      %242 = dma.vmem_to_hbm [thread:$0]  %s240, 128, %s4, [#allocation4]
    $region29: #{tpu_custom_call.1} parent=1 // pred_fallthru
      _
    // Predicated region
    $region30: #{tpu_custom_call.1} parent=1 // pred_check
      _
    $region31: #{tpu_custom_call.1} parent=1 // pred_check_branch
      %244 = sbr.rel (0) target = $region33
    $region32: #{tpu_custom_call.1} parent=1 // pred_region
      %245 = dma.done [#allocation4], 128
    $region33: #{tpu_custom_call.1} parent=1 // pred_fallthru
      _
    %246 = vsyncpa [#allocation3], 1
    %247 = vsyncpa [#allocation6], 1
    %248 = vsyncpa [#allocation4], 1

</llo_original>
